<compile_context>
chip_gen: v5e
topology: v5e:2x2
jax: 0.10.0
libtpu: 0.0.40
codegen_flags: <defaults>
</compile_context>

<pallas_src>
import functools

import jax
import jax.numpy as jnp
from jax.experimental import pallas as pl
from jax.experimental.pallas import tpu as pltpu

_LANE = 128


def _round_up(x: int, m: int) -> int:
    return (x + m - 1) // m * m


def _cdiv(a: int, b: int) -> int:
    return (a + b - 1) // b


def _sublane(dtype) -> int:
    """Second-minor tiling multiple for a dtype (sub-32-bit packs along sublanes)."""
    itemsize = jnp.dtype(dtype).itemsize
    if itemsize >= 4:
        return 8
    if itemsize == 2:
        return 16
    return 32


def _vmem_capacity_bytes() -> int:
    """Physical VMEM of the current chip; conservative (v7x, 64 MiB) fallback."""
    try:
        info = pltpu.get_tpu_info()
        cap = getattr(info, "vmem_capacity_bytes", None)
        if cap:
            return int(cap)
    except Exception:
        pass
    return 64 * 1024 * 1024


def _vmapped_linear_kernel(x_ref, w_ref, b_ref, o_ref):
    # x_ref: [TILE_M, K]     tile of flattened (B*A) rows (double-buffered)
    # w_ref: [K, N_pad]      pre-transposed weight (single-buffered, resident)
    # b_ref: [1, N_pad]      f32 bias (single-buffered, resident)
    # o_ref: [TILE_M, N_pad]
    acc = jnp.dot(x_ref[...], w_ref[...], preferred_element_type=jnp.float32)
    o_ref[...] = (acc + b_ref[...]).astype(o_ref.dtype)


def _choose_tiling(M: int, K: int, n_pad: int, x_dtype, w_dtype):
    """Generation-aware tile sizing. Returns (tile_m, grid_m, m_pad, vmem_limit)."""
    x_item = jnp.dtype(x_dtype).itemsize
    w_item = jnp.dtype(w_dtype).itemsize
    sub = _sublane(x_dtype)

    phys = _vmem_capacity_bytes()
    budget = int(phys * 0.6)  # working-set budget; headroom for Mosaic scratch

    # Resident, single-buffered operands (weight + f32 bias).
    resident = K * n_pad * w_item + n_pad * 4
    # Per-row cost of the pipelined operands: double-buffered x row + out row.
    per_row = 2 * K * x_item + 2 * n_pad * x_item

    avail = budget - resident
    if avail > 0:
        tile_max = max(sub, (avail // per_row) // sub * sub)
    else:
        tile_max = sub  # weight barely fits; dispatch normally avoids this path

    grid_m = max(1, _cdiv(M, tile_max))
    # Keep >= 2 grid steps whenever there is enough work so the "parallel" M
    # axis can shard across the 2 TensorCores on v7x. One extra ~0.35us step
    # is negligible for a mem-bound kernel on 1-TC v5e/v6e.
    if grid_m == 1 and M >= 2 * sub:
        grid_m = 2

    tile_m = _round_up(_cdiv(M, grid_m), sub)
    m_pad = grid_m * tile_m

    working = 2 * tile_m * K * x_item + 2 * tile_m * n_pad * x_item + resident
    vmem_limit = working + 4 * 1024 * 1024
    vmem_limit = max(vmem_limit, 16 * 1024 * 1024)
    vmem_limit = min(vmem_limit, phys - 4 * 1024 * 1024)
    return tile_m, grid_m, m_pad, int(vmem_limit)


def prepare_vmap_linear_params(weight, bias):
    """One-time parameter prep (hoist to setup, NOT per training step).

    weight: [D_out, D_in] (PyTorch nn.Linear layout), bias: [D_out]
    returns (w_kn [K, N_pad], b2d f32 [1, N_pad], D_out)
    """
    d_out, d_in = weight.shape
    n_pad = _round_up(d_out, _LANE)
    w_kn = weight.T                                   # [K, N]
    b2d = bias.astype(jnp.float32).reshape(1, d_out)  # f32 epilogue add
    if n_pad != d_out:
        w_kn = jnp.pad(w_kn, ((0, 0), (0, n_pad - d_out)))
        b2d = jnp.pad(b2d, ((0, 0), (0, n_pad - d_out)))
    return w_kn, b2d, d_out


@functools.partial(jax.jit, static_argnames=("n_out",))
def vmap_linear_apply(x, w_kn, b2d, *, n_out):
    """Apply the shared linear over the agent axis with pre-prepared params.

    x: [B, A, K], w_kn: [K, N_pad], b2d: [1, N_pad] -> [B, A, n_out]
    """
    B, A, K = x.shape
    k_w, n_pad = w_kn.shape
    assert k_w == K, "weight / input feature mismatch"
    M = B * A

    tile_m, grid_m, m_pad, vmem_limit = _choose_tiling(M, K, n_pad, x.dtype, w_kn.dtype)

    x2d = x.reshape(M, K)
    if m_pad != M:
        x2d = jnp.pad(x2d, ((0, m_pad - M), (0, 0)))

    itemsize = jnp.dtype(x.dtype).itemsize
    cost = pl.CostEstimate(
        flops=2 * m_pad * K * n_pad,
        transcendentals=0,
        bytes_accessed=(m_pad * K + m_pad * n_pad) * itemsize
        + K * n_pad * jnp.dtype(w_kn.dtype).itemsize
        + n_pad * 4,
    )

    out2d = pl.pallas_call(
        _vmapped_linear_kernel,
        out_shape=jax.ShapeDtypeStruct((m_pad, n_pad), x.dtype),
        grid=(grid_m,),
        in_specs=[
            # x tile: pipelined / double-buffered over the M grid.
            pl.BlockSpec((tile_m, K), lambda i: (i, 0)),
            # Weight & bias: grid-invariant -> single buffer (no wasted 2nd copy).
            pl.BlockSpec((K, n_pad), lambda i: (0, 0), pipeline_mode=pl.Buffered(1)),
            pl.BlockSpec((1, n_pad), lambda i: (0, 0), pipeline_mode=pl.Buffered(1)),
        ],
        out_specs=pl.BlockSpec((tile_m, n_pad), lambda i: (i, 0)),
        compiler_params=pltpu.CompilerParams(
            dimension_semantics=("parallel",),  # shard M across TCs on v7x
            vmem_limit_bytes=vmem_limit,
        ),
        cost_estimate=cost,
    )(x2d, w_kn, b2d)

    return out2d[:M, :n_out].reshape(B, A, n_out)


def vmap_linear(x, weight, bias, *, force_pallas=False):
    """Pallas equivalent of Vmap(nn.Linear(D_in, D_out), in_dims=1, out_dims=1).

    x: [B, A, D_in], weight: [D_out, D_in], bias: [D_out] -> [B, A, D_out]
    """
    B, A, K = x.shape
    n_out = weight.shape[0]
    M = B * A
    n_pad = _round_up(n_out, _LANE)

    # Dispatch gate: tiny problems are a few vregs -> XLA's fused dot+add wins;
    # huge weights would not fit VMEM-resident -> fall back as well.
    # TODO(synk): add an inner "arbitrary" K grid axis + f32 VMEM accumulator
    # for very large D_in instead of falling back to XLA.
    resident = K * n_pad * jnp.dtype(weight.dtype).itemsize
    too_small = M * (K + n_out) < (1 << 15)
    too_big = resident > int(_vmem_capacity_bytes() * 0.3)
    if (too_small or too_big) and not force_pallas:
        return jnp.einsum("bak,nk->ban", x, weight) + bias

    # NOTE: in a real training loop call prepare_vmap_linear_params once at
    # setup and reuse (w_kn, b2d); done inline here for a self-contained demo.
    w_kn, b2d, _ = prepare_vmap_linear_params(weight, bias)
    return vmap_linear_apply(x, w_kn, b2d, n_out=n_out)


if __name__ == "__main__":
    # Small shapes consistent with the module's use over an agent axis.
    B, A, D_in, D_out = 16, 8, 32, 32

    key = jax.random.PRNGKey(0)
    kx, kw, kb = jax.random.split(key, 3)

    x = jax.random.normal(kx, (B, A, D_in), dtype=jnp.float32)
    # Deterministic "nn.Linear(D_in, D_out)" parameters (synthetic init).
    weight = jax.random.normal(kw, (D_out, D_in), dtype=jnp.float32) * 0.1
    bias = jax.random.normal(kb, (D_out,), dtype=jnp.float32) * 0.1

    # Exercise the Pallas path explicitly (auto-dispatch would route this
    # tiny MAPPO-sized problem to the plain XLA einsum fallback).
    out = vmap_linear(x, weight, bias, force_pallas=True)
    out = jax.block_until_ready(out)

    # Reference: vmap of the shared linear over axis 1 (== broadcasted linear).
    ref = jnp.einsum("bad,nd->ban", x, weight) + bias
    assert out.shape == (B, A, D_out)
    assert jnp.allclose(out, ref, atol=1e-5, rtol=1e-5)

    # Also sanity-check the auto-dispatch (einsum fallback) path.
    out_auto = jax.block_until_ready(vmap_linear(x, weight, bias))
    assert jnp.allclose(out_auto, ref, atol=1e-5, rtol=1e-5)

    print("KERNEL_OK")
</pallas_src>

<mosaic_0001>
module attributes {stable_mosaic.version = 11 : i64} {
  func.func @_vmapped_linear_kernel(%arg0: i32, %arg1: memref<64x32xf32, #tpu.memory_space<vmem>>, %arg2: memref<32x128xf32, #tpu.memory_space<vmem>>, %arg3: memref<1x128xf32, #tpu.memory_space<vmem>>, %arg4: memref<64x128xf32, #tpu.memory_space<vmem>>) attributes {dimension_semantics = [#tpu.dimension_semantics<parallel>], iteration_bounds = array<i64: 2>, scalar_prefetch = 0 : i64, scratch_operands = 0 : i64, tpu.core_type = #tpu.core_type<tc>, window_params = [{transform_indices = @transform_0, window_bounds = array<i64: 64, 32>}, {pipeline_mode = #tpu.pipeline_mode<synchronous>, transform_indices = @transform_1, window_bounds = array<i64: 32, 128>}, {pipeline_mode = #tpu.pipeline_mode<synchronous>, transform_indices = @transform_2, window_bounds = array<i64: 1, 128>}, {transform_indices = @transform_3, window_bounds = array<i64: 64, 128>}]} {
    %c0 = arith.constant 0 : index
    %c0_0 = arith.constant 0 : index
    %0 = vector.load %arg1[%c0, %c0_0] : memref<64x32xf32, #tpu.memory_space<vmem>>, vector<64x32xf32>
    %c0_1 = arith.constant 0 : index
    %c0_2 = arith.constant 0 : index
    %1 = vector.load %arg2[%c0_1, %c0_2] : memref<32x128xf32, #tpu.memory_space<vmem>>, vector<32x128xf32>
    %cst = arith.constant dense<0.000000e+00> : vector<64x128xf32>
    %2 = tpu.matmul %0, %1, %cst {dimension_numbers = #tpu.dot_dimension_numbers<[1], [0], [0], [1], [0, 0, 1, 1], [], []>} : vector<64x32xf32>, vector<32x128xf32>, vector<64x128xf32> -> vector<64x128xf32>
    %c0_3 = arith.constant 0 : index
    %c0_4 = arith.constant 0 : index
    %3 = vector.load %arg3[%c0_3, %c0_4] : memref<1x128xf32, #tpu.memory_space<vmem>>, vector<1x128xf32>
    %4 = vector.broadcast %3 : vector<1x128xf32> to vector<64x128xf32>
    %5 = arith.addf %2, %4 : vector<64x128xf32>
    %c0_5 = arith.constant 0 : index
    %c0_6 = arith.constant 0 : index
    %6 = vector.load %arg4[%c0_5, %c0_6] : memref<64x128xf32, #tpu.memory_space<vmem>>, vector<64x128xf32>
    tpu.vector_store %arg4[%c0_5, %c0_6], %5 {strides = array<i32>} : memref<64x128xf32, #tpu.memory_space<vmem>>, vector<64x128xf32>,
    return
  }
  func.func @transform_0(%arg0: i32) -> (i32, i32) {
    %c0_i32 = arith.constant 0 : i32
    %c0_i32_0 = arith.constant 0 : i32
    return %arg0, %c0_i32 : i32, i32
  }
  func.func @transform_1(%arg0: i32) -> (i32, i32) {
    %c0_i32 = arith.constant 0 : i32
    %c0_i32_0 = arith.constant 0 : i32
    %c0_i32_1 = arith.constant 0 : i32
    return %c0_i32, %c0_i32_0 : i32, i32
  }
  func.func @transform_2(%arg0: i32) -> (i32, i32) {
    %c0_i32 = arith.constant 0 : i32
    %c0_i32_0 = arith.constant 0 : i32
    %c0_i32_1 = arith.constant 0 : i32
    return %c0_i32, %c0_i32_0 : i32, i32
  }
  func.func @transform_3(%arg0: i32) -> (i32, i32) {
    %c0_i32 = arith.constant 0 : i32
    %c0_i32_0 = arith.constant 0 : i32
    return %arg0, %c0_i32 : i32, i32
  }
}

</mosaic_0001>

<llo_original>
// kernel: vmap_linear_apply.1
$region0: #{vmap_linear_apply.1}
  #allocation0 [shape = 'u32[]', space=smem, size = 0x4, offset = 0x4, fixed_abs, tag = 'smem constant byte address 0x4 - core index']
  #allocation1 [shape = 'u32[72,128]{1,0:T(1,128)}', space=vmem, size = 0x9000, scoped, tag = 'internal scratch']
  %s0 = inlined_call_operand.hbm [shape: f32[128,32], index: 0, kind: input, shape index: {}]
  %s1 = inlined_call_operand.hbm [shape: f32[32,128], index: 1, kind: input, shape index: {}]
  %s2 = inlined_call_operand.vmem [shape: f32[1,128], index: 2, kind: input, shape index: {}]
  %s3 = inlined_call_operand.vmem [shape: f32[128,128], index: 3, kind: output, shape index: {}]
  %s4 = sld [smem:[#allocation0]]
  $region53: #{vmap_linear_apply.1} parent=0
    _
  %s6 = ssub.s32 1, %s4
  %s7 = scalar_select 0, %s6, %s4
  $region1: #{vmap_linear_apply.1} parent=0
    #allocation2 [shape = 'u8[65536]{0}', space=vmem, size = 0x10000, scoped, tag = 'input window, operand 0']
    #allocation3 [shape = 's32[2]{0}', space=sflag, size = 0x8, scoped, tag = 'scoped memory for vmap_linear_apply.1']
    #allocation4 [shape = 'u8[16384]{0}', space=vmem, size = 0x4000, scoped, tag = 'input window, operand 1, single buffered']
    #allocation5 [shape = 's32[1]{0}', space=sflag, size = 0x4, scoped, tag = 'scoped memory for vmap_linear_apply.1']
    %8 = vsyncpa [#allocation3], 0
    %s9 = scalar_lea.sflag [#allocation3], 1
    %10 = vsyncpa %s9, 0
    %11 = vsyncpa [#allocation5], 0
    loop: start=0, step=1, limit=4
    $region2: #{vmap_linear_apply.1} parent=1 // loop_pre_header
      _
    $region3: #{vmap_linear_apply.1} parent=1 // loop_header
      %s13 = sphi 0, %s17
      %p14 = scmp.ge.s32.totalorder %s13, 4
      %s23 = sphi 0, %s25
      %s26 = sphi 0, %s23
      %s27 = sphi 0, %s26
      %s43 = sphi 0, %s27
      %s47 = sphi 0, %s47
      %s49 = sphi 0, %s47
      %s50 = sphi 0, %s49
      %s64 = sphi 0, %s50
      %s68 = sphi 0, %s68
      %s70 = sphi 0, %s68
      %s71 = sphi 0, %s70
      %s85 = sphi 0, %s71
      %s91 = sphi 0, %s93
      %s94 = sphi 0, %s91
      %s95 = sphi 0, %s94
      %s111 = sphi 0, %s95
    $region4: #{vmap_linear_apply.1} parent=1 // loop_header_branch
      %16 = sbr.rel (%p14) target = $region8
    $region5: #{vmap_linear_apply.1} parent=1 // loop_body
      %s18 = ssub.s32 %s13, 1
      %s19 = ssub.s32 %s13, 2
      %s20 = sadd.s32 %s13, 1
      %s21 = ssub.s32 %s13, %s20
      %p22 = scmp.eq.s32.totalorder %s21, 0
      %s24 = sadd.s32 %s23, 1
      %s25 = scalar_select %p22, %s23, %s24
      %p28 = pneg %p22
      %p29 = scmp.eq.s32.totalorder %s13, 1
      %p30 = por %p28, %p29
      %p31 = scmp.ne.s32.totalorder %s23, %s26
      %p32 = scmp.eq.s32.totalorder %s13, 0
      %p33 = por %p31, %p32
      %p34 = scmp.ne.s32.totalorder %s23, %s26
      %p35 = scmp.eq.s32.totalorder %s18, 1
      %p36 = por %p34, %p35
      %p37 = scmp.ne.s32.totalorder %s26, %s27
      %p38 = scmp.eq.s32.totalorder %s18, 0
      %p39 = por %p37, %p38
      %p40 = scmp.ne.s32.totalorder %s26, %s27
      %p41 = scmp.eq.s32.totalorder %s19, 1
      %p42 = por %p40, %p41
      %p44 = scmp.ne.s32.totalorder %s27, %s43
      %p45 = scmp.eq.s32.totalorder %s19, 0
      %p46 = por %p44, %p45
      %s48 = sadd.s32 %s47, 1
      %p51 = scmp.eq.s32.totalorder %s13, 1
      %p52 = scmp.ne.s32.totalorder %s47, %s49
      %p53 = scmp.eq.s32.totalorder %s13, 0
      %p54 = por %p52, %p53
      %p55 = scmp.ne.s32.totalorder %s47, %s49
      %p56 = scmp.eq.s32.totalorder %s18, 1
      %p57 = por %p55, %p56
      %p58 = scmp.ne.s32.totalorder %s49, %s50
      %p59 = scmp.eq.s32.totalorder %s18, 0
      %p60 = por %p58, %p59
      %p61 = scmp.ne.s32.totalorder %s49, %s50
      %p62 = scmp.eq.s32.totalorder %s19, 1
      %p63 = por %p61, %p62
      %p65 = scmp.ne.s32.totalorder %s50, %s64
      %p66 = scmp.eq.s32.totalorder %s19, 0
      %p67 = por %p65, %p66
      %s69 = sadd.s32 %s68, 1
      %p72 = scmp.eq.s32.totalorder %s13, 1
      %p73 = scmp.ne.s32.totalorder %s68, %s70
      %p74 = scmp.eq.s32.totalorder %s13, 0
      %p75 = por %p73, %p74
      %p76 = scmp.ne.s32.totalorder %s68, %s70
      %p77 = scmp.eq.s32.totalorder %s18, 1
      %p78 = por %p76, %p77
      %p79 = scmp.ne.s32.totalorder %s70, %s71
      %p80 = scmp.eq.s32.totalorder %s18, 0
      %p81 = por %p79, %p80
      %p82 = scmp.ne.s32.totalorder %s70, %s71
      %p83 = scmp.eq.s32.totalorder %s19, 1
      %p84 = por %p82, %p83
      %p86 = scmp.ne.s32.totalorder %s71, %s85
      %p87 = scmp.eq.s32.totalorder %s19, 0
      %p88 = por %p86, %p87
      %s89 = ssub.s32 %s13, %s20
      %p90 = scmp.eq.s32.totalorder %s89, 0
      %s92 = sadd.s32 %s91, 1
      %s93 = scalar_select %p90, %s91, %s92
      %p96 = pneg %p90
      %p97 = scmp.eq.s32.totalorder %s13, 1
      %p98 = por %p96, %p97
      %p99 = scmp.ne.s32.totalorder %s91, %s94
      %p100 = scmp.eq.s32.totalorder %s13, 0
      %p101 = por %p99, %p100
      %p102 = scmp.ne.s32.totalorder %s91, %s94
      %p103 = scmp.eq.s32.totalorder %s18, 1
      %p104 = por %p102, %p103
      %p105 = scmp.ne.s32.totalorder %s94, %s95
      %p106 = scmp.eq.s32.totalorder %s18, 0
      %p107 = por %p105, %p106
      %p108 = scmp.ne.s32.totalorder %s94, %s95
      %p109 = scmp.eq.s32.totalorder %s19, 1
      %p110 = por %p108, %p109
      %p112 = scmp.ne.s32.totalorder %s95, %s111
      %p113 = scmp.eq.s32.totalorder %s19, 0
      %p114 = por %p112, %p113
      %p115 = scmp.le.s32.totalorder 1, %s13
      %p116 = scmp.lt.s32.totalorder %s13, 3
      %p117 = pnand %p115, %p116
      %p118 = pneg %p117
      // Predicated region
      $region9: #{vmap_linear_apply.1} parent=5 // pred_check
        _
      $region10: #{vmap_linear_apply.1} parent=5 // pred_check_branch
        %120 = sbr.rel (%p117) target = $region12
      $region11: #{vmap_linear_apply.1} parent=5 // pred_region
        %s121 = ssub.s32 %s13, 1
        // Predicated region
        $region13: #{vmap_linear_apply.1} parent=11 // pred_check
          %p122 = pneg %p60
        $region14: #{vmap_linear_apply.1} parent=11 // pred_check_branch
          %124 = sbr.rel (%p122) target = $region16
        $region15: #{vmap_linear_apply.1} parent=11 // pred_region
          %126 = vsyncadd [#allocation5], 0
          %s127 = sshll.u32 %s1, 4
          %s128 = int_to_ptr.hbm [resolvable:$true] %s127
          %s129 = sshll.u32 [#allocation4], 4
          %s130 = int_to_ptr.vmem [resolvable:$true] %s129
          %135 = dma.hbm_to_vmem [thread:$0]  %s128, 512, %s130, [#allocation5], 128, 128, 8
        $region16: #{vmap_linear_apply.1} parent=11 // pred_fallthru
          _
        // Predicated region
        $region17: #{vmap_linear_apply.1} parent=11 // pred_check
          %p136 = pneg %p81
        $region18: #{vmap_linear_apply.1} parent=11 // pred_check_branch
          %138 = sbr.rel (%p136) target = $region20
        $region19: #{vmap_linear_apply.1} parent=11 // pred_region
          _
        $region20: #{vmap_linear_apply.1} parent=11 // pred_fallthru
          _
      $region12: #{vmap_linear_apply.1} parent=5 // pred_fallthru
        _
      %p139 = scmp.lt.s32.totalorder %s13, 2
      // Predicated region
      $region21: #{vmap_linear_apply.1} parent=5 // pred_check
        %p140 = pneg %p139
      $region22: #{vmap_linear_apply.1} parent=5 // pred_check_branch
        %142 = sbr.rel (%p140) target = $region24
      $region23: #{vmap_linear_apply.1} parent=5 // pred_region
        // Predicated region
        $region25: #{vmap_linear_apply.1} parent=23 // pred_check
          %p143 = pneg %p33
        $region26: #{vmap_linear_apply.1} parent=23 // pred_check_branch
          %145 = sbr.rel (%p143) target = $region28
        $region27: #{vmap_linear_apply.1} parent=23 // pred_region
          %s146 = sand.u32 %s23, 1
          %s147 = scalar_lea.sflag [#allocation3], %s146
          %s148 = sand.u32 %s23, 1
          %s149 = smul.addr %s148, 64
          %s150 = scalar_lea.vmem [#allocation2], %s149
          %s151 = smul.u32 8, %s13
          %153 = vsyncadd %s147, 0
          %s154 = smul.addr %s151, 8
          %s155 = scalar_lea.hbm %s0, %s154
          %s156 = sshll.u32 %s155, 4
          %s157 = int_to_ptr.hbm [resolvable:$true] %s156
          %s158 = sshll.u32 %s150, 4
          %s159 = int_to_ptr.vmem [resolvable:$true] %s158
          %164 = dma.hbm_to_vmem [thread:$0]  %s157, 1024, %s159, %s147, 128, 128, 8
        $region28: #{vmap_linear_apply.1} parent=23 // pred_fallthru
          _
      $region24: #{vmap_linear_apply.1} parent=5 // pred_fallthru
        _
      %p165 = scmp.le.s32.totalorder 1, %s13
      %p166 = scmp.lt.s32.totalorder %s13, 3
      %p167 = pnand %p165, %p166
      %p168 = pneg %p167
      // Predicated region
      $region29: #{vmap_linear_apply.1} parent=5 // pred_check
        _
      $region30: #{vmap_linear_apply.1} parent=5 // pred_check_branch
        %170 = sbr.rel (%p167) target = $region32
      $region31: #{vmap_linear_apply.1} parent=5 // pred_region
        %s171 = ssub.s32 %s13, 1
        %s172 = sand.u32 %s26, 1
        %s173 = scalar_lea.sflag [#allocation3], %s172
        %s174 = sand.u32 %s26, 1
        %s175 = smul.addr %s174, 64
        %s176 = scalar_lea.vmem [#allocation2], %s175
        // Predicated region
        $region33: #{vmap_linear_apply.1} parent=31 // pred_check
          %p177 = pneg %p39
        $region34: #{vmap_linear_apply.1} parent=31 // pred_check_branch
          %179 = sbr.rel (%p177) target = $region36
        $region35: #{vmap_linear_apply.1} parent=31 // pred_region
          %181 = dma.done %s173, 1024
        $region36: #{vmap_linear_apply.1} parent=31 // pred_fallthru
          _
        // Predicated region
        $region37: #{vmap_linear_apply.1} parent=31 // pred_check
          %p182 = pneg %p60
        $region38: #{vmap_linear_apply.1} parent=31 // pred_check_branch
          %184 = sbr.rel (%p182) target = $region40
        $region39: #{vmap_linear_apply.1} parent=31 // pred_region
          %186 = dma.done [#allocation5], 512
        $region40: #{vmap_linear_apply.1} parent=31 // pred_fallthru
          _
        %s187 = sand.u32 %s26, 1
        %s188 = scalar_lea.sflag [#allocation3], %s187
        %s189 = sand.u32 %s26, 1
        %s190 = smul.addr %s189, 64
        %s191 = scalar_lea.vmem [#allocation2], %s190
        %p192 = pneg %p39
        %p193 = pneg %p36
        %p194 = pneg %p60
        %p195 = pneg %p57
        %p196 = pneg %p81
        %p197 = pneg %p78
        %p198 = pneg %p107
        %p199 = pneg %p104
        %s200 = smul.u32 8, %s18
        %p201 = scmp.lt.s32.totalorder %s200, 15
        %s202 = scalar_select %p201, %s200, 15
        %s203 = smul.addr %s202, 8
        %s204 = scalar_lea.vmem %s3, %s203
        %s205 = smul.u32 8, %s18
        %s206 = smul.u32 8, %s18
        %p207 = scmp.lt.s32.totalorder %s206, 15
        %s208 = scalar_select %p207, %s206, 15
        %s209 = smul.addr %s208, 8
        %s210 = scalar_lea.vmem %s3, %s209
        %s211 = smul.u32 8, %s18
        %v212 = vld [vmem:[%s176] sm:$0xff]
        %v213 = vld [vmem:[%s176 + $0x8] sm:$0xff]
        %v214 = vld [vmem:[%s176 + $0x10] sm:$0xff]
        %v215 = vld [vmem:[%s176 + $0x18] sm:$0xff]
        %v216 = vld [vmem:[%s176 + $0x20] sm:$0xff]
        %v217 = vld [vmem:[%s176 + $0x28] sm:$0xff]
        %v218 = vld [vmem:[%s176 + $0x30] sm:$0xff]
        %v219 = vld [vmem:[%s176 + $0x38] sm:$0xff]
        %v220 = vld [vmem:[#allocation4] sm:$0xff]
        %v221 = vld [vmem:[#allocation4 + $0x8] sm:$0xff]
        %v222 = vld [vmem:[#allocation4 + $0x10] sm:$0xff]
        %v223 = vld [vmem:[#allocation4 + $0x18] sm:$0xff]
        %v224 = vld [vmem:[%s2] sm:$0x1]
        %v226 = vperm.slane %v224, 0
        %vm228 = vcmask 261120
        %v230 = vsel %vm228, %v212, 0
        %v233 = vsel %vm228, %v213, 0
        %v236 = vsel %vm228, %v214, 0
        %v239 = vsel %vm228, %v215, 0
        %v242 = vsel %vm228, %v216, 0
        %v245 = vsel %vm228, %v217, 0
        %v248 = vsel %vm228, %v218, 0
        %v251 = vsel %vm228, %v219, 0
        %253 = vmatpush.msra.mxu0 0.0
        %254 = vmatpush.msra.mxu0 0.0
        %255 = vmatpush.msra.mxu0 0.0
        %256 = vmatpush.msra.mxu0 0.0
        %257 = vmatpush.msra.mxu0 0.0
        %258 = vmatpush.msra.mxu0 0.0
        %259 = vmatpush.msra.mxu0 0.0
        %260 = vmatpush.msra.mxu0 0.0
        %261 = vmatpush.msra.mxu0 0.0
        %262 = vmatpush.msra.mxu0 0.0
        %263 = vmatpush.msra.mxu0 0.0
        %264 = vmatpush.msra.mxu0 0.0
        %265 = vmatpush.msra.mxu0 %v223
        %266 = vmatpush.msra.mxu0 %v222
        %267 = vmatpush.msra.mxu0 %v221
        %268 = vmatpush.msra.mxu0 %v220
        %269 = vmatmul.f32.gmra.mxu0 %v230
        %v270 = vpop.f32.mrf.mxu0
        %v271 = vadd.f32 %v226, %v270
        %272 = vmatmul.f32.gmra.mxu0 %v233
        %v273 = vpop.f32.mrf.mxu0
        %v274 = vadd.f32 %v226, %v273
        %275 = vmatmul.f32.gmra.mxu0 %v236
        %v276 = vpop.f32.mrf.mxu0
        %v277 = vadd.f32 %v226, %v276
        %278 = vmatmul.f32.gmra.mxu0 %v239
        %v279 = vpop.f32.mrf.mxu0
        %v280 = vadd.f32 %v226, %v279
        %281 = vmatmul.f32.gmra.mxu0 %v242
        %v282 = vpop.f32.mrf.mxu0
        %v283 = vadd.f32 %v226, %v282
        %284 = vmatmul.f32.gmra.mxu0 %v245
        %v285 = vpop.f32.mrf.mxu0
        %v286 = vadd.f32 %v226, %v285
        %287 = vmatmul.f32.gmra.mxu0 %v248
        %v288 = vpop.f32.mrf.mxu0
        %v289 = vadd.f32 %v226, %v288
        %290 = vmatmul.f32.gmra.mxu0 %v251
        %v291 = vpop.f32.mrf.mxu0
        %v292 = vadd.f32 %v226, %v291
        %293 = vdwg.mxu0
        %294 = vst [vmem:[%s210] sm:$0xff] %v271
        %295 = vst [vmem:[%s210 + $0x8] sm:$0xff] %v274
        %296 = vst [vmem:[%s210 + $0x10] sm:$0xff] %v277
        %297 = vst [vmem:[%s210 + $0x18] sm:$0xff] %v280
        %298 = vst [vmem:[%s210 + $0x20] sm:$0xff] %v283
        %299 = vst [vmem:[%s210 + $0x28] sm:$0xff] %v286
        %300 = vst [vmem:[%s210 + $0x30] sm:$0xff] %v289
        %301 = vst [vmem:[%s210 + $0x38] sm:$0xff] %v292
        %s302 = smul.u32 8, %s18
        %p303 = scmp.lt.s32.totalorder %s302, 15
        %s304 = scalar_select %p303, %s302, 15
        %s305 = smul.addr %s304, 8
        %s306 = scalar_lea.vmem %s3, %s305
        // Predicated region
        $region41: #{vmap_linear_apply.1} parent=31 // pred_check
          %p307 = pneg %p104
        $region42: #{vmap_linear_apply.1} parent=31 // pred_check_branch
          %309 = sbr.rel (%p307) target = $region44
        $region43: #{vmap_linear_apply.1} parent=31 // pred_region
          %s310 = smul.u32 8, %s18
        $region44: #{vmap_linear_apply.1} parent=31 // pred_fallthru
          _
      $region32: #{vmap_linear_apply.1} parent=5 // pred_fallthru
        _
      %p311 = scmp.le.s32.totalorder 2, %s13
      // Predicated region
      $region45: #{vmap_linear_apply.1} parent=5 // pred_check
        %p312 = pneg %p311
      $region46: #{vmap_linear_apply.1} parent=5 // pred_check_branch
        %314 = sbr.rel (%p312) target = $region48
      $region47: #{vmap_linear_apply.1} parent=5 // pred_region
        %s315 = ssub.s32 %s13, 2
        // Predicated region
        $region49: #{vmap_linear_apply.1} parent=47 // pred_check
          %p316 = pneg %p110
        $region50: #{vmap_linear_apply.1} parent=47 // pred_check_branch
          %318 = sbr.rel (%p316) target = $region52
        $region51: #{vmap_linear_apply.1} parent=47 // pred_region
          %s319 = smul.u32 8, %s19
          %p320 = scmp.lt.s32.totalorder %s319, 15
          %s321 = scalar_select %p320, %s319, 15
          %s322 = smul.addr %s321, 8
          %s323 = scalar_lea.vmem %s3, %s322
        $region52: #{vmap_linear_apply.1} parent=47 // pred_fallthru
          _
      $region48: #{vmap_linear_apply.1} parent=5 // pred_fallthru
        _
    $region6: #{vmap_linear_apply.1} parent=1 // loop_footer
      %s17 = sadd.s32 1, %s13
    $region7: #{vmap_linear_apply.1} parent=1 // loop_footer_branch
      %12 = sbr.rel target = $region3
    $region8: #{vmap_linear_apply.1} parent=1 // loop_exit
      _
    %324 = vsyncpa [#allocation3], 1
    %s325 = scalar_lea.sflag [#allocation3], 1
    %326 = vsyncpa %s325, 1
    %327 = vsyncpa [#allocation5], 1

</llo_original>
